<compile_context>
chip_gen: v7x
topology: tpu7x:2x2x1
jax: 0.10.0
libtpu: 0.0.40
codegen_flags: <defaults>
</compile_context>

<pallas_src>
import functools
import math

import jax
import jax.numpy as jnp
from jax.experimental import pallas as pl
from jax.experimental.pallas import tpu as pltpu


def _dma_copy_kernel(flat_f, x_hbm, *rest):
    """rest = (out_ref_0, ..., out_ref_{n_pairs-1}, dma_sems)."""
    out_refs = rest[:-1]
    sems = rest[-1]
    copies = []
    for j, out_ref in enumerate(out_refs):
        # Slab j = (layer j//2, kv j%2): a lane-contiguous strip of x2 = (B, L*2*F).
        # Static slice on the HBM ref -> strided HBM->HBM DMA (B rows of F elements).
        src = x_hbm.at[:, j * flat_f:(j + 1) * flat_f]
        cp = pltpu.make_async_copy(src, out_ref, sems.at[j])
        cp.start()
        copies.append(cp)
    # All 2*num_head DMAs are in flight concurrently; now wait for completion.
    for cp in copies:
        cp.wait()


def reshape_forward(x, *, seq_len, num_layer, hidden_size, num_head):
    assert hidden_size % num_head == 0
    # Reference quirk: the returned loop indexes the *layer* axis with range(num_head).
    assert num_head <= num_layer, "reference semantics require num_head <= num_layer"
    embed = hidden_size // num_head
    batch = x.shape[0]
    flat_f = num_head * seq_len * embed          # flattened (H, S, E) slab per (layer, kv)
    total = num_layer * 2 * flat_f
    # Review fix: explicit shape check so a padded / mismatched trailing dim cannot
    # silently alias the wrong slabs.
    if math.prod(x.shape[1:]) != total:
        raise ValueError(
            f"x has {math.prod(x.shape[1:])} elements per batch row, expected "
            f"num_layer*2*num_head*seq_len*embed_per_head = {total}")
    x2 = x.reshape(batch, total)                 # contiguous view, free

    n_used = num_head                            # layers actually consumed (reference quirk)
    n_pairs = 2 * n_used
    itemsize = jnp.dtype(x.dtype).itemsize
    used_bytes = n_pairs * batch * flat_f * itemsize
    cost = pl.CostEstimate(flops=0, transcendentals=0, bytes_accessed=2 * used_bytes)

    outs = pl.pallas_call(
        functools.partial(_dma_copy_kernel, flat_f),
        in_specs=[pl.BlockSpec(memory_space=pl.ANY)],
        out_specs=[pl.BlockSpec(memory_space=pl.ANY)] * n_pairs,
        out_shape=[jax.ShapeDtypeStruct((batch, flat_f), x.dtype)] * n_pairs,
        scratch_shapes=[pltpu.SemaphoreType.DMA((n_pairs,))],
        cost_estimate=cost,
    )(x2)

    # Free contiguous views back to (B, H, S, E); pair into (key, value) tuples.
    past_key_values = []
    for i in range(n_used):
        k_arr = outs[2 * i].reshape(batch, num_head, seq_len, embed)
        v_arr = outs[2 * i + 1].reshape(batch, num_head, seq_len, embed)
        past_key_values.append((k_arr, v_arr))
    return tuple(past_key_values)


if __name__ == "__main__":
    # Small shapes consistent with the module; num_head <= num_layer so the
    # reference layer-indexing quirk is well defined.
    batch_size = 2
    seq_len = 8
    num_layer = 4
    num_head = 4
    hidden_size = 32
    embed_per_head = hidden_size // num_head  # 8

    flat = num_layer * 2 * num_head * seq_len * embed_per_head
    key = jax.random.PRNGKey(0)
    x = jax.random.normal(key, (batch_size, flat), dtype=jnp.float32)

    pkv = reshape_forward(
        x,
        seq_len=seq_len,
        num_layer=num_layer,
        hidden_size=hidden_size,
        num_head=num_head,
    )
    jax.block_until_ready(pkv)

    # Pure-JAX reference (same permute, same layer-indexing quirk).
    x6 = x.reshape(batch_size, num_layer, 2, num_head, seq_len, embed_per_head)
    ref = jnp.transpose(x6, (1, 2, 0, 3, 4, 5))
    for i in range(num_head):
        assert pkv[i][0].shape == (batch_size, num_head, seq_len, embed_per_head)
        assert jnp.array_equal(pkv[i][0], ref[i, 0])
        assert jnp.array_equal(pkv[i][1], ref[i, 1])

    # TODO(synk): PyTorch's `requires_grad` assert has no JAX analogue (grads are transform-based).
    print("KERNEL_OK")
</pallas_src>

<mosaic_0001>
module attributes {stable_mosaic.version = 11 : i64} {
  func.func @_dma_copy_kernel(%arg0: memref<2x2048xf32, #tpu.memory_space<any>>, %arg1: memref<2x256xf32, #tpu.memory_space<any>>, %arg2: memref<2x256xf32, #tpu.memory_space<any>>, %arg3: memref<2x256xf32, #tpu.memory_space<any>>, %arg4: memref<2x256xf32, #tpu.memory_space<any>>, %arg5: memref<2x256xf32, #tpu.memory_space<any>>, %arg6: memref<2x256xf32, #tpu.memory_space<any>>, %arg7: memref<2x256xf32, #tpu.memory_space<any>>, %arg8: memref<2x256xf32, #tpu.memory_space<any>>, %arg9: memref<8x!tpu.dma_semaphore, #tpu.memory_space<semaphore_mem>>) attributes {dimension_semantics = [], scalar_prefetch = 0 : i64, scratch_operands = 1 : i64, tpu.core_type = #tpu.core_type<tc>} {
    %c0_i32 = arith.constant 0 : i32
    %c0_i32_0 = arith.constant 0 : i32
    %c0_i32_1 = arith.constant 0 : i32
    %0 = tpu.memref_slice %arg0[%c0_i32_0, %c0_i32_1] : memref<2x2048xf32, #tpu.memory_space<any>> -> memref<2x256xf32, #tpu.memory_space<any>>
    %1 = tpu.memref_slice %arg9[%c0_i32] : memref<8x!tpu.dma_semaphore, #tpu.memory_space<semaphore_mem>> -> memref<1x!tpu.dma_semaphore, #tpu.memory_space<semaphore_mem>>
    %2 = tpu.memref_squeeze %1 : memref<1x!tpu.dma_semaphore, #tpu.memory_space<semaphore_mem>> -> memref<!tpu.dma_semaphore, #tpu.memory_space<semaphore_mem>>
    tpu.enqueue_dma source(%0 : memref<2x256xf32, #tpu.memory_space<any>>) target(%arg1 : memref<2x256xf32, #tpu.memory_space<any>>) target_semaphore(%2 : memref<!tpu.dma_semaphore, #tpu.memory_space<semaphore_mem>>)
    %c1_i32 = arith.constant 1 : i32
    %c0_i32_2 = arith.constant 0 : i32
    %c256_i32 = arith.constant 256 : i32
    %3 = tpu.memref_slice %arg0[%c0_i32_2, %c256_i32] : memref<2x2048xf32, #tpu.memory_space<any>> -> memref<2x256xf32, #tpu.memory_space<any>>
    %4 = tpu.memref_slice %arg9[%c1_i32] : memref<8x!tpu.dma_semaphore, #tpu.memory_space<semaphore_mem>> -> memref<1x!tpu.dma_semaphore, #tpu.memory_space<semaphore_mem>>
    %5 = tpu.memref_squeeze %4 : memref<1x!tpu.dma_semaphore, #tpu.memory_space<semaphore_mem>> -> memref<!tpu.dma_semaphore, #tpu.memory_space<semaphore_mem>>
    tpu.enqueue_dma source(%3 : memref<2x256xf32, #tpu.memory_space<any>>) target(%arg2 : memref<2x256xf32, #tpu.memory_space<any>>) target_semaphore(%5 : memref<!tpu.dma_semaphore, #tpu.memory_space<semaphore_mem>>)
    %c2_i32 = arith.constant 2 : i32
    %c0_i32_3 = arith.constant 0 : i32
    %c512_i32 = arith.constant 512 : i32
    %6 = tpu.memref_slice %arg0[%c0_i32_3, %c512_i32] : memref<2x2048xf32, #tpu.memory_space<any>> -> memref<2x256xf32, #tpu.memory_space<any>>
    %7 = tpu.memref_slice %arg9[%c2_i32] : memref<8x!tpu.dma_semaphore, #tpu.memory_space<semaphore_mem>> -> memref<1x!tpu.dma_semaphore, #tpu.memory_space<semaphore_mem>>
    %8 = tpu.memref_squeeze %7 : memref<1x!tpu.dma_semaphore, #tpu.memory_space<semaphore_mem>> -> memref<!tpu.dma_semaphore, #tpu.memory_space<semaphore_mem>>
    tpu.enqueue_dma source(%6 : memref<2x256xf32, #tpu.memory_space<any>>) target(%arg3 : memref<2x256xf32, #tpu.memory_space<any>>) target_semaphore(%8 : memref<!tpu.dma_semaphore, #tpu.memory_space<semaphore_mem>>)
    %c3_i32 = arith.constant 3 : i32
    %c0_i32_4 = arith.constant 0 : i32
    %c768_i32 = arith.constant 768 : i32
    %9 = tpu.memref_slice %arg0[%c0_i32_4, %c768_i32] : memref<2x2048xf32, #tpu.memory_space<any>> -> memref<2x256xf32, #tpu.memory_space<any>>
    %10 = tpu.memref_slice %arg9[%c3_i32] : memref<8x!tpu.dma_semaphore, #tpu.memory_space<semaphore_mem>> -> memref<1x!tpu.dma_semaphore, #tpu.memory_space<semaphore_mem>>
    %11 = tpu.memref_squeeze %10 : memref<1x!tpu.dma_semaphore, #tpu.memory_space<semaphore_mem>> -> memref<!tpu.dma_semaphore, #tpu.memory_space<semaphore_mem>>
    tpu.enqueue_dma source(%9 : memref<2x256xf32, #tpu.memory_space<any>>) target(%arg4 : memref<2x256xf32, #tpu.memory_space<any>>) target_semaphore(%11 : memref<!tpu.dma_semaphore, #tpu.memory_space<semaphore_mem>>)
    %c4_i32 = arith.constant 4 : i32
    %c0_i32_5 = arith.constant 0 : i32
    %c1024_i32 = arith.constant 1024 : i32
    %12 = tpu.memref_slice %arg0[%c0_i32_5, %c1024_i32] : memref<2x2048xf32, #tpu.memory_space<any>> -> memref<2x256xf32, #tpu.memory_space<any>>
    %13 = tpu.memref_slice %arg9[%c4_i32] : memref<8x!tpu.dma_semaphore, #tpu.memory_space<semaphore_mem>> -> memref<1x!tpu.dma_semaphore, #tpu.memory_space<semaphore_mem>>
    %14 = tpu.memref_squeeze %13 : memref<1x!tpu.dma_semaphore, #tpu.memory_space<semaphore_mem>> -> memref<!tpu.dma_semaphore, #tpu.memory_space<semaphore_mem>>
    tpu.enqueue_dma source(%12 : memref<2x256xf32, #tpu.memory_space<any>>) target(%arg5 : memref<2x256xf32, #tpu.memory_space<any>>) target_semaphore(%14 : memref<!tpu.dma_semaphore, #tpu.memory_space<semaphore_mem>>)
    %c5_i32 = arith.constant 5 : i32
    %c0_i32_6 = arith.constant 0 : i32
    %c1280_i32 = arith.constant 1280 : i32
    %15 = tpu.memref_slice %arg0[%c0_i32_6, %c1280_i32] : memref<2x2048xf32, #tpu.memory_space<any>> -> memref<2x256xf32, #tpu.memory_space<any>>
    %16 = tpu.memref_slice %arg9[%c5_i32] : memref<8x!tpu.dma_semaphore, #tpu.memory_space<semaphore_mem>> -> memref<1x!tpu.dma_semaphore, #tpu.memory_space<semaphore_mem>>
    %17 = tpu.memref_squeeze %16 : memref<1x!tpu.dma_semaphore, #tpu.memory_space<semaphore_mem>> -> memref<!tpu.dma_semaphore, #tpu.memory_space<semaphore_mem>>
    tpu.enqueue_dma source(%15 : memref<2x256xf32, #tpu.memory_space<any>>) target(%arg6 : memref<2x256xf32, #tpu.memory_space<any>>) target_semaphore(%17 : memref<!tpu.dma_semaphore, #tpu.memory_space<semaphore_mem>>)
    %c6_i32 = arith.constant 6 : i32
    %c0_i32_7 = arith.constant 0 : i32
    %c1536_i32 = arith.constant 1536 : i32
    %18 = tpu.memref_slice %arg0[%c0_i32_7, %c1536_i32] : memref<2x2048xf32, #tpu.memory_space<any>> -> memref<2x256xf32, #tpu.memory_space<any>>
    %19 = tpu.memref_slice %arg9[%c6_i32] : memref<8x!tpu.dma_semaphore, #tpu.memory_space<semaphore_mem>> -> memref<1x!tpu.dma_semaphore, #tpu.memory_space<semaphore_mem>>
    %20 = tpu.memref_squeeze %19 : memref<1x!tpu.dma_semaphore, #tpu.memory_space<semaphore_mem>> -> memref<!tpu.dma_semaphore, #tpu.memory_space<semaphore_mem>>
    tpu.enqueue_dma source(%18 : memref<2x256xf32, #tpu.memory_space<any>>) target(%arg7 : memref<2x256xf32, #tpu.memory_space<any>>) target_semaphore(%20 : memref<!tpu.dma_semaphore, #tpu.memory_space<semaphore_mem>>)
    %c7_i32 = arith.constant 7 : i32
    %c0_i32_8 = arith.constant 0 : i32
    %c1792_i32 = arith.constant 1792 : i32
    %21 = tpu.memref_slice %arg0[%c0_i32_8, %c1792_i32] : memref<2x2048xf32, #tpu.memory_space<any>> -> memref<2x256xf32, #tpu.memory_space<any>>
    %22 = tpu.memref_slice %arg9[%c7_i32] : memref<8x!tpu.dma_semaphore, #tpu.memory_space<semaphore_mem>> -> memref<1x!tpu.dma_semaphore, #tpu.memory_space<semaphore_mem>>
    %23 = tpu.memref_squeeze %22 : memref<1x!tpu.dma_semaphore, #tpu.memory_space<semaphore_mem>> -> memref<!tpu.dma_semaphore, #tpu.memory_space<semaphore_mem>>
    tpu.enqueue_dma source(%21 : memref<2x256xf32, #tpu.memory_space<any>>) target(%arg8 : memref<2x256xf32, #tpu.memory_space<any>>) target_semaphore(%23 : memref<!tpu.dma_semaphore, #tpu.memory_space<semaphore_mem>>)
    %c0_i32_9 = arith.constant 0 : i32
    %c0_i32_10 = arith.constant 0 : i32
    %c0_i32_11 = arith.constant 0 : i32
    %24 = tpu.memref_slice %arg0[%c0_i32_10, %c0_i32_11] : memref<2x2048xf32, #tpu.memory_space<any>> -> memref<2x256xf32, #tpu.memory_space<any>>
    %25 = tpu.memref_slice %arg9[%c0_i32_9] : memref<8x!tpu.dma_semaphore, #tpu.memory_space<semaphore_mem>> -> memref<1x!tpu.dma_semaphore, #tpu.memory_space<semaphore_mem>>
    %26 = tpu.memref_squeeze %25 : memref<1x!tpu.dma_semaphore, #tpu.memory_space<semaphore_mem>> -> memref<!tpu.dma_semaphore, #tpu.memory_space<semaphore_mem>>
    tpu.wait_dma2 semaphore(%26 : memref<!tpu.dma_semaphore, #tpu.memory_space<semaphore_mem>>) src(%24 : memref<2x256xf32, #tpu.memory_space<any>>) dst(%arg1 : memref<2x256xf32, #tpu.memory_space<any>>)
    %c1_i32_12 = arith.constant 1 : i32
    %c0_i32_13 = arith.constant 0 : i32
    %c256_i32_14 = arith.constant 256 : i32
    %27 = tpu.memref_slice %arg0[%c0_i32_13, %c256_i32_14] : memref<2x2048xf32, #tpu.memory_space<any>> -> memref<2x256xf32, #tpu.memory_space<any>>
    %28 = tpu.memref_slice %arg9[%c1_i32_12] : memref<8x!tpu.dma_semaphore, #tpu.memory_space<semaphore_mem>> -> memref<1x!tpu.dma_semaphore, #tpu.memory_space<semaphore_mem>>
    %29 = tpu.memref_squeeze %28 : memref<1x!tpu.dma_semaphore, #tpu.memory_space<semaphore_mem>> -> memref<!tpu.dma_semaphore, #tpu.memory_space<semaphore_mem>>
    tpu.wait_dma2 semaphore(%29 : memref<!tpu.dma_semaphore, #tpu.memory_space<semaphore_mem>>) src(%27 : memref<2x256xf32, #tpu.memory_space<any>>) dst(%arg2 : memref<2x256xf32, #tpu.memory_space<any>>)
    %c2_i32_15 = arith.constant 2 : i32
    %c0_i32_16 = arith.constant 0 : i32
    %c512_i32_17 = arith.constant 512 : i32
    %30 = tpu.memref_slice %arg0[%c0_i32_16, %c512_i32_17] : memref<2x2048xf32, #tpu.memory_space<any>> -> memref<2x256xf32, #tpu.memory_space<any>>
    %31 = tpu.memref_slice %arg9[%c2_i32_15] : memref<8x!tpu.dma_semaphore, #tpu.memory_space<semaphore_mem>> -> memref<1x!tpu.dma_semaphore, #tpu.memory_space<semaphore_mem>>
    %32 = tpu.memref_squeeze %31 : memref<1x!tpu.dma_semaphore, #tpu.memory_space<semaphore_mem>> -> memref<!tpu.dma_semaphore, #tpu.memory_space<semaphore_mem>>
    tpu.wait_dma2 semaphore(%32 : memref<!tpu.dma_semaphore, #tpu.memory_space<semaphore_mem>>) src(%30 : memref<2x256xf32, #tpu.memory_space<any>>) dst(%arg3 : memref<2x256xf32, #tpu.memory_space<any>>)
    %c3_i32_18 = arith.constant 3 : i32
    %c0_i32_19 = arith.constant 0 : i32
    %c768_i32_20 = arith.constant 768 : i32
    %33 = tpu.memref_slice %arg0[%c0_i32_19, %c768_i32_20] : memref<2x2048xf32, #tpu.memory_space<any>> -> memref<2x256xf32, #tpu.memory_space<any>>
    %34 = tpu.memref_slice %arg9[%c3_i32_18] : memref<8x!tpu.dma_semaphore, #tpu.memory_space<semaphore_mem>> -> memref<1x!tpu.dma_semaphore, #tpu.memory_space<semaphore_mem>>
    %35 = tpu.memref_squeeze %34 : memref<1x!tpu.dma_semaphore, #tpu.memory_space<semaphore_mem>> -> memref<!tpu.dma_semaphore, #tpu.memory_space<semaphore_mem>>
    tpu.wait_dma2 semaphore(%35 : memref<!tpu.dma_semaphore, #tpu.memory_space<semaphore_mem>>) src(%33 : memref<2x256xf32, #tpu.memory_space<any>>) dst(%arg4 : memref<2x256xf32, #tpu.memory_space<any>>)
    %c4_i32_21 = arith.constant 4 : i32
    %c0_i32_22 = arith.constant 0 : i32
    %c1024_i32_23 = arith.constant 1024 : i32
    %36 = tpu.memref_slice %arg0[%c0_i32_22, %c1024_i32_23] : memref<2x2048xf32, #tpu.memory_space<any>> -> memref<2x256xf32, #tpu.memory_space<any>>
    %37 = tpu.memref_slice %arg9[%c4_i32_21] : memref<8x!tpu.dma_semaphore, #tpu.memory_space<semaphore_mem>> -> memref<1x!tpu.dma_semaphore, #tpu.memory_space<semaphore_mem>>
    %38 = tpu.memref_squeeze %37 : memref<1x!tpu.dma_semaphore, #tpu.memory_space<semaphore_mem>> -> memref<!tpu.dma_semaphore, #tpu.memory_space<semaphore_mem>>
    tpu.wait_dma2 semaphore(%38 : memref<!tpu.dma_semaphore, #tpu.memory_space<semaphore_mem>>) src(%36 : memref<2x256xf32, #tpu.memory_space<any>>) dst(%arg5 : memref<2x256xf32, #tpu.memory_space<any>>)
    %c5_i32_24 = arith.constant 5 : i32
    %c0_i32_25 = arith.constant 0 : i32
    %c1280_i32_26 = arith.constant 1280 : i32
    %39 = tpu.memref_slice %arg0[%c0_i32_25, %c1280_i32_26] : memref<2x2048xf32, #tpu.memory_space<any>> -> memref<2x256xf32, #tpu.memory_space<any>>
    %40 = tpu.memref_slice %arg9[%c5_i32_24] : memref<8x!tpu.dma_semaphore, #tpu.memory_space<semaphore_mem>> -> memref<1x!tpu.dma_semaphore, #tpu.memory_space<semaphore_mem>>
    %41 = tpu.memref_squeeze %40 : memref<1x!tpu.dma_semaphore, #tpu.memory_space<semaphore_mem>> -> memref<!tpu.dma_semaphore, #tpu.memory_space<semaphore_mem>>
    tpu.wait_dma2 semaphore(%41 : memref<!tpu.dma_semaphore, #tpu.memory_space<semaphore_mem>>) src(%39 : memref<2x256xf32, #tpu.memory_space<any>>) dst(%arg6 : memref<2x256xf32, #tpu.memory_space<any>>)
    %c6_i32_27 = arith.constant 6 : i32
    %c0_i32_28 = arith.constant 0 : i32
    %c1536_i32_29 = arith.constant 1536 : i32
    %42 = tpu.memref_slice %arg0[%c0_i32_28, %c1536_i32_29] : memref<2x2048xf32, #tpu.memory_space<any>> -> memref<2x256xf32, #tpu.memory_space<any>>
    %43 = tpu.memref_slice %arg9[%c6_i32_27] : memref<8x!tpu.dma_semaphore, #tpu.memory_space<semaphore_mem>> -> memref<1x!tpu.dma_semaphore, #tpu.memory_space<semaphore_mem>>
    %44 = tpu.memref_squeeze %43 : memref<1x!tpu.dma_semaphore, #tpu.memory_space<semaphore_mem>> -> memref<!tpu.dma_semaphore, #tpu.memory_space<semaphore_mem>>
    tpu.wait_dma2 semaphore(%44 : memref<!tpu.dma_semaphore, #tpu.memory_space<semaphore_mem>>) src(%42 : memref<2x256xf32, #tpu.memory_space<any>>) dst(%arg7 : memref<2x256xf32, #tpu.memory_space<any>>)
    %c7_i32_30 = arith.constant 7 : i32
    %c0_i32_31 = arith.constant 0 : i32
    %c1792_i32_32 = arith.constant 1792 : i32
    %45 = tpu.memref_slice %arg0[%c0_i32_31, %c1792_i32_32] : memref<2x2048xf32, #tpu.memory_space<any>> -> memref<2x256xf32, #tpu.memory_space<any>>
    %46 = tpu.memref_slice %arg9[%c7_i32_30] : memref<8x!tpu.dma_semaphore, #tpu.memory_space<semaphore_mem>> -> memref<1x!tpu.dma_semaphore, #tpu.memory_space<semaphore_mem>>
    %47 = tpu.memref_squeeze %46 : memref<1x!tpu.dma_semaphore, #tpu.memory_space<semaphore_mem>> -> memref<!tpu.dma_semaphore, #tpu.memory_space<semaphore_mem>>
    tpu.wait_dma2 semaphore(%47 : memref<!tpu.dma_semaphore, #tpu.memory_space<semaphore_mem>>) src(%45 : memref<2x256xf32, #tpu.memory_space<any>>) dst(%arg8 : memref<2x256xf32, #tpu.memory_space<any>>)
    return
  }
}

</mosaic_0001>

<llo_original>
// kernel: tpu_custom_call.1
$region0: #{tpu_custom_call.1}
  #allocation0 [shape = 'u32[]', space=smem, size = 0x4, offset = 0x4, fixed_abs, tag = 'smem constant byte address 0x4 - core index']
  #allocation1 [shape = 'u32[144,128]{1,0:T(1,128)}', space=vmem, size = 0x12000, scoped, tag = 'internal scratch']
  #allocation2 [shape = 's32[8]{0}', space=sflag, size = 0x20, scoped, tag = 'scratch operand']
  #allocation3 [shape = 's32[]', space=sflag, size = 0x4, offset = 0, fixed_abs, tag = 'sflag constant byte address 0x0 - dummy sync flag']
  #allocation4 [shape = 'u32[0]{0}', space=smem, size = 0, offset = 0, fixed_abs, tag = 'smem constant byte address 0x0 - null']
  #allocation5 [shape = 's32[]', space=sflag, size = 0x4, offset = 0, fixed_abs, tag = 'sflag constant byte address 0x0 - dummy sync flag']
  #allocation6 [shape = 'u32[0]{0}', space=smem, size = 0, offset = 0, fixed_abs, tag = 'smem constant byte address 0x0 - null']
  #allocation7 [shape = 's32[]', space=sflag, size = 0x4, offset = 0, fixed_abs, tag = 'sflag constant byte address 0x0 - dummy sync flag']
  #allocation8 [shape = 'u32[0]{0}', space=smem, size = 0, offset = 0, fixed_abs, tag = 'smem constant byte address 0x0 - null']
  #allocation9 [shape = 's32[]', space=sflag, size = 0x4, offset = 0, fixed_abs, tag = 'sflag constant byte address 0x0 - dummy sync flag']
  #allocation10 [shape = 'u32[0]{0}', space=smem, size = 0, offset = 0, fixed_abs, tag = 'smem constant byte address 0x0 - null']
  #allocation11 [shape = 's32[]', space=sflag, size = 0x4, offset = 0, fixed_abs, tag = 'sflag constant byte address 0x0 - dummy sync flag']
  #allocation12 [shape = 'u32[0]{0}', space=smem, size = 0, offset = 0, fixed_abs, tag = 'smem constant byte address 0x0 - null']
  #allocation13 [shape = 's32[]', space=sflag, size = 0x4, offset = 0, fixed_abs, tag = 'sflag constant byte address 0x0 - dummy sync flag']
  #allocation14 [shape = 'u32[0]{0}', space=smem, size = 0, offset = 0, fixed_abs, tag = 'smem constant byte address 0x0 - null']
  #allocation15 [shape = 's32[]', space=sflag, size = 0x4, offset = 0, fixed_abs, tag = 'sflag constant byte address 0x0 - dummy sync flag']
  #allocation16 [shape = 'u32[0]{0}', space=smem, size = 0, offset = 0, fixed_abs, tag = 'smem constant byte address 0x0 - null']
  #allocation17 [shape = 's32[]', space=sflag, size = 0x4, offset = 0, fixed_abs, tag = 'sflag constant byte address 0x0 - dummy sync flag']
  #allocation18 [shape = 'u32[0]{0}', space=smem, size = 0, offset = 0, fixed_abs, tag = 'smem constant byte address 0x0 - null']
  %s0 = inlined_call_operand.hbm [shape: f32[2,2048], index: 0, kind: input, shape index: {}]
  %s1 = inlined_call_operand.hbm [shape: f32[2,256], index: 1, kind: output, shape index: {0}]
  %s2 = inlined_call_operand.hbm [shape: f32[2,256], index: 2, kind: output, shape index: {1}]
  %s3 = inlined_call_operand.hbm [shape: f32[2,256], index: 3, kind: output, shape index: {2}]
  %s4 = inlined_call_operand.hbm [shape: f32[2,256], index: 4, kind: output, shape index: {3}]
  %s5 = inlined_call_operand.hbm [shape: f32[2,256], index: 5, kind: output, shape index: {4}]
  %s6 = inlined_call_operand.hbm [shape: f32[2,256], index: 6, kind: output, shape index: {5}]
  %s7 = inlined_call_operand.hbm [shape: f32[2,256], index: 7, kind: output, shape index: {6}]
  %s8 = inlined_call_operand.hbm [shape: f32[2,256], index: 8, kind: output, shape index: {7}]
  %9 = xla_tuple %s1, %s2, %s3, %s4, %s5, %s6, %s7, %s8
  %s10 = sld [smem:[#allocation0]]
  $region2: #{tpu_custom_call.1} parent=0
    _
  %s12 = ssub.s32 1, %s10
  %s13 = scalar_select 0, %s12, %s10
  %s15 = sshll.u32 1, 14
  %s16 = sxor.u32 4294967295, %s15
  %s19 = sshll.u32 3, 24
  %s20 = sxor.u32 4294967295, %s19
  %s21 = sand.u32 0, %s20
  %s23 = sor.u32 %s21, 0
  %26 = dma.general %s0, 64, %s1, [#allocation2], [#allocation3], [#allocation4], %s23, 0
  %s27 = scalar_lea.hbm %s0, 64
  %s28 = scalar_lea.sflag [#allocation2], 1
  %s30 = sshll.u32 1, 14
  %s31 = sxor.u32 4294967295, %s30
  %s34 = sshll.u32 3, 24
  %s35 = sxor.u32 4294967295, %s34
  %s36 = sand.u32 0, %s35
  %s38 = sor.u32 %s36, 0
  %41 = dma.general %s27, 64, %s2, %s28, [#allocation5], [#allocation6], %s38, 0
  %s42 = scalar_lea.hbm %s0, 128
  %s43 = scalar_lea.sflag [#allocation2], 2
  %s45 = sshll.u32 1, 14
  %s46 = sxor.u32 4294967295, %s45
  %s49 = sshll.u32 3, 24
  %s50 = sxor.u32 4294967295, %s49
  %s51 = sand.u32 0, %s50
  %s53 = sor.u32 %s51, 0
  %56 = dma.general %s42, 64, %s3, %s43, [#allocation7], [#allocation8], %s53, 0
  %s57 = scalar_lea.hbm %s0, 192
  %s58 = scalar_lea.sflag [#allocation2], 3
  %s60 = sshll.u32 1, 14
  %s61 = sxor.u32 4294967295, %s60
  %s64 = sshll.u32 3, 24
  %s65 = sxor.u32 4294967295, %s64
  %s66 = sand.u32 0, %s65
  %s68 = sor.u32 %s66, 0
  %71 = dma.general %s57, 64, %s4, %s58, [#allocation9], [#allocation10], %s68, 0
  %s72 = scalar_lea.hbm %s0, 256
  %s73 = scalar_lea.sflag [#allocation2], 4
  %s75 = sshll.u32 1, 14
  %s76 = sxor.u32 4294967295, %s75
  %s79 = sshll.u32 3, 24
  %s80 = sxor.u32 4294967295, %s79
  %s81 = sand.u32 0, %s80
  %s83 = sor.u32 %s81, 0
  %86 = dma.general %s72, 64, %s5, %s73, [#allocation11], [#allocation12], %s83, 0
  %s87 = scalar_lea.hbm %s0, 320
  %s88 = scalar_lea.sflag [#allocation2], 5
  %s90 = sshll.u32 1, 14
  %s91 = sxor.u32 4294967295, %s90
  %s94 = sshll.u32 3, 24
  %s95 = sxor.u32 4294967295, %s94
  %s96 = sand.u32 0, %s95
  %s98 = sor.u32 %s96, 0
  %101 = dma.general %s87, 64, %s6, %s88, [#allocation13], [#allocation14], %s98, 0
  %s102 = scalar_lea.hbm %s0, 384
  %s103 = scalar_lea.sflag [#allocation2], 6
  %s105 = sshll.u32 1, 14
  %s106 = sxor.u32 4294967295, %s105
  %s109 = sshll.u32 3, 24
  %s110 = sxor.u32 4294967295, %s109
  %s111 = sand.u32 0, %s110
  %s113 = sor.u32 %s111, 0
  %116 = dma.general %s102, 64, %s7, %s103, [#allocation15], [#allocation16], %s113, 0
  %s117 = scalar_lea.hbm %s0, 448
  %s118 = scalar_lea.sflag [#allocation2], 7
  %s120 = sshll.u32 1, 14
  %s121 = sxor.u32 4294967295, %s120
  %s124 = sshll.u32 3, 24
  %s125 = sxor.u32 4294967295, %s124
  %s126 = sand.u32 0, %s125
  %s128 = sor.u32 %s126, 0
  %131 = dma.general %s117, 64, %s8, %s118, [#allocation17], [#allocation18], %s128, 0
  %s132 = smul.u32 2, 1
  %s133 = smul.u32 %s132, 2
  %s134 = sshll.u32 %s133, 4
  %135 = dma.done [#allocation2], %s134
  %s136 = sshll.u32 %s133, 4
  %137 = dma.done %s28, %s136
  %s138 = sshll.u32 %s133, 4
  %139 = dma.done %s43, %s138
  %s140 = sshll.u32 %s133, 4
  %141 = dma.done %s58, %s140
  %s142 = sshll.u32 %s133, 4
  %143 = dma.done %s73, %s142
  %s144 = sshll.u32 %s133, 4
  %145 = dma.done %s88, %s144
  %s146 = sshll.u32 %s133, 4
  %147 = dma.done %s103, %s146
  %s148 = sshll.u32 %s133, 4
  %149 = dma.done %s118, %s148
  %150 = vsyncmov [#allocation2]
  %s151 = vpop.sfrf %150
  %p152 = scmp.eq.s32.totalorder %s151, 0
  %p153 = pneg %p152
  %155 = shalt.err (%p153)
  %s156 = scalar_lea.sflag [#allocation2], 1
  %157 = vsyncmov %s156
  %s158 = vpop.sfrf %157
  %p159 = scmp.eq.s32.totalorder %s158, 0
  %p160 = pneg %p159
  %162 = shalt.err (%p160)
  %s163 = scalar_lea.sflag [#allocation2], 2
  %164 = vsyncmov %s163
  %s165 = vpop.sfrf %164
  %p166 = scmp.eq.s32.totalorder %s165, 0
  %p167 = pneg %p166
  %169 = shalt.err (%p167)
  %s170 = scalar_lea.sflag [#allocation2], 3
  %171 = vsyncmov %s170
  %s172 = vpop.sfrf %171
  %p173 = scmp.eq.s32.totalorder %s172, 0
  %p174 = pneg %p173
  %176 = shalt.err (%p174)
  %s177 = scalar_lea.sflag [#allocation2], 4
  %178 = vsyncmov %s177
  %s179 = vpop.sfrf %178
  %p180 = scmp.eq.s32.totalorder %s179, 0
  %p181 = pneg %p180
  %183 = shalt.err (%p181)
  %s184 = scalar_lea.sflag [#allocation2], 5
  %185 = vsyncmov %s184
  %s186 = vpop.sfrf %185
  %p187 = scmp.eq.s32.totalorder %s186, 0
  %p188 = pneg %p187
  %190 = shalt.err (%p188)
  %s191 = scalar_lea.sflag [#allocation2], 6
  %192 = vsyncmov %s191
  %s193 = vpop.sfrf %192
  %p194 = scmp.eq.s32.totalorder %s193, 0
  %p195 = pneg %p194
  %197 = shalt.err (%p195)
  %s198 = scalar_lea.sflag [#allocation2], 7
  %199 = vsyncmov %s198
  %s200 = vpop.sfrf %199
  %p201 = scmp.eq.s32.totalorder %s200, 0
  %p202 = pneg %p201
  %204 = shalt.err (%p202)

</llo_original>
